<compile_context>
chip_gen: v6e
topology: v6e:2x2x1
jax: 0.10.0
libtpu: 0.0.40
codegen_flags: <defaults>
</compile_context>

<pallas_src>
import jax
import jax.numpy as jnp
from jax.experimental import pallas as pl
from jax.experimental.pallas import tpu as pltpu

IN_FEATURES = 318
HIDDEN = 128
NUM_CLASSES = 10
PADDED_CLASSES = 128   # lane-dense output width
DEFAULT_TILE_B = 512   # multiple of 256 -> full MXU passes on v6e/v7x


def _round_up(n, m):
    return ((n + m - 1) // m) * m


def graphnet_kernel(x_ref, w1_ref, b1_ref, w2_ref, b2_ref, o_ref):
    # x_ref:  (TILE_B, 318)            bf16
    # w1_ref: (318, 128)               bf16
    # b1_ref: (1, 128)                 f32
    # w2_ref: (128, PADDED_CLASSES)    bf16 (zero-padded columns beyond num_classes)
    # b2_ref: (1, PADDED_CLASSES)      f32  (zero-padded)
    # o_ref:  (TILE_B, PADDED_CLASSES) f32
    h = jnp.dot(x_ref[...], w1_ref[...], preferred_element_type=jnp.float32)
    h = jnp.maximum(h + b1_ref[...], 0.0)  # bias + ReLU in f32
    y = jnp.dot(h.astype(jnp.bfloat16), w2_ref[...],
                preferred_element_type=jnp.float32)
    o_ref[...] = (y + b2_ref[...]).astype(o_ref.dtype)


def graphnet_forward(x, w1, b1, w2, b2):
    """x: (B, 318) f32; w1: (318,128); b1: (128,)|(1,128); w2: (128,C); b2: (C,)|(1,C)."""
    B, F = x.shape
    assert F == IN_FEATURES
    num_classes = w2.shape[1]
    assert num_classes <= PADDED_CLASSES

    # Choose a batch tile: large (512) for real batches, sized down for tiny ones.
    tile_b = DEFAULT_TILE_B if B >= DEFAULT_TILE_B else _round_up(B, 8)
    Bp = _round_up(B, tile_b)

    # bf16 inputs / weights, f32 accumulation and biases.
    x_b = x.astype(jnp.bfloat16)
    if Bp != B:
        x_b = jnp.pad(x_b, ((0, Bp - B), (0, 0)))
    w1_b = w1.astype(jnp.bfloat16)
    w2_b = jnp.pad(w2.astype(jnp.bfloat16),
                   ((0, 0), (0, PADDED_CLASSES - num_classes)))
    b1_f = jnp.reshape(b1.astype(jnp.float32), (1, HIDDEN))
    b2_f = jnp.pad(jnp.reshape(b2.astype(jnp.float32), (1, num_classes)),
                   ((0, 0), (0, PADDED_CLASSES - num_classes)))

    grid = (Bp // tile_b,)
    out = pl.pallas_call(
        graphnet_kernel,
        out_shape=jax.ShapeDtypeStruct((Bp, PADDED_CLASSES), jnp.float32),
        grid_spec=pltpu.PrefetchScalarGridSpec(
            num_scalar_prefetch=0,
            grid=grid,
            in_specs=[
                pl.BlockSpec((tile_b, IN_FEATURES), lambda i: (i, 0)),        # x tile (streams)
                pl.BlockSpec((IN_FEATURES, HIDDEN), lambda i: (0, 0)),        # w1 (resident)
                pl.BlockSpec((1, HIDDEN), lambda i: (0, 0)),                  # b1
                pl.BlockSpec((HIDDEN, PADDED_CLASSES), lambda i: (0, 0)),     # w2 (padded)
                pl.BlockSpec((1, PADDED_CLASSES), lambda i: (0, 0)),          # b2 (padded)
            ],
            out_specs=pl.BlockSpec((tile_b, PADDED_CLASSES), lambda i: (i, 0)),
        ),
        compiler_params=pltpu.CompilerParams(
            dimension_semantics=("parallel",),
        ),
    )(x_b, w1_b, b1_f, w2_b, b2_f)

    return out[:B, :num_classes]


def init_params(key, num_classes=NUM_CLASSES):
    # Mimics PyTorch Linear's uniform(-1/sqrt(fan_in), 1/sqrt(fan_in)).
    k1, k2, k3, k4 = jax.random.split(key, 4)
    lim1 = 1.0 / jnp.sqrt(jnp.float32(IN_FEATURES))
    lim2 = 1.0 / jnp.sqrt(jnp.float32(HIDDEN))
    w1 = jax.random.uniform(k1, (IN_FEATURES, HIDDEN), jnp.float32, -lim1, lim1)
    b1 = jax.random.uniform(k2, (1, HIDDEN), jnp.float32, -lim1, lim1)
    w2 = jax.random.uniform(k3, (HIDDEN, num_classes), jnp.float32, -lim2, lim2)
    b2 = jax.random.uniform(k4, (1, num_classes), jnp.float32, -lim2, lim2)
    return w1, b1, w2, b2


if __name__ == "__main__":
    key = jax.random.PRNGKey(0)
    kx, kp = jax.random.split(key)

    B = 16  # small test batch; wrapper pads to the batch tile internally
    x = jax.random.normal(kx, (B, IN_FEATURES), jnp.float32)
    w1, b1, w2, b2 = init_params(kp, NUM_CLASSES)

    out = graphnet_forward(x, w1, b1, w2, b2)
    out = jax.block_until_ready(out)
    assert out.shape == (B, NUM_CLASSES)

    # Reference with matching precision (bf16 operands, f32 accumulation).
    xb, w1b, w2b = x.astype(jnp.bfloat16), w1.astype(jnp.bfloat16), w2.astype(jnp.bfloat16)
    h_ref = jnp.maximum(jnp.dot(xb, w1b, preferred_element_type=jnp.float32) + b1, 0.0)
    ref_bf16 = jnp.dot(h_ref.astype(jnp.bfloat16), w2b,
                       preferred_element_type=jnp.float32) + b2
    assert jnp.allclose(out, ref_bf16, atol=2e-3, rtol=2e-3)

    # Sanity check vs. full-f32 math (looser tolerance for bf16 operand rounding).
    ref_f32 = jnp.maximum(x @ w1 + b1, 0.0) @ w2 + b2
    assert jnp.allclose(out, ref_f32, atol=5e-2, rtol=5e-2)

    print("KERNEL_OK")
</pallas_src>

<mosaic_0001>
module attributes {stable_mosaic.version = 11 : i64} {
  func.func @graphnet_kernel(%arg0: i32, %arg1: memref<16x318xbf16, #tpu.memory_space<vmem>>, %arg2: memref<318x128xbf16, #tpu.memory_space<vmem>>, %arg3: memref<1x128xf32, #tpu.memory_space<vmem>>, %arg4: memref<128x128xbf16, #tpu.memory_space<vmem>>, %arg5: memref<1x128xf32, #tpu.memory_space<vmem>>, %arg6: memref<16x128xf32, #tpu.memory_space<vmem>>) attributes {dimension_semantics = [#tpu.dimension_semantics<parallel>], iteration_bounds = array<i64: 1>, scalar_prefetch = 0 : i64, scratch_operands = 0 : i64, tpu.core_type = #tpu.core_type<tc>, window_params = [{transform_indices = @transform_0, window_bounds = array<i64: 16, 318>}, {pipeline_mode = #tpu.pipeline_mode<synchronous>, transform_indices = @transform_1, window_bounds = array<i64: 318, 128>}, {pipeline_mode = #tpu.pipeline_mode<synchronous>, transform_indices = @transform_2, window_bounds = array<i64: 1, 128>}, {pipeline_mode = #tpu.pipeline_mode<synchronous>, transform_indices = @transform_3, window_bounds = array<i64: 128, 128>}, {pipeline_mode = #tpu.pipeline_mode<synchronous>, transform_indices = @transform_4, window_bounds = array<i64: 1, 128>}, {transform_indices = @transform_5, window_bounds = array<i64: 16, 128>}]} {
    %c0 = arith.constant 0 : index
    %c0_0 = arith.constant 0 : index
    %0 = vector.load %arg1[%c0, %c0_0] : memref<16x318xbf16, #tpu.memory_space<vmem>>, vector<16x318xbf16>
    %c0_1 = arith.constant 0 : index
    %c0_2 = arith.constant 0 : index
    %1 = vector.load %arg2[%c0_1, %c0_2] : memref<318x128xbf16, #tpu.memory_space<vmem>>, vector<318x128xbf16>
    %cst = arith.constant dense<0.000000e+00> : vector<16x128xf32>
    %2 = tpu.matmul %0, %1, %cst {dimension_numbers = #tpu.dot_dimension_numbers<[1], [0], [0], [1], [0, 0, 1, 1], [], []>} : vector<16x318xbf16>, vector<318x128xbf16>, vector<16x128xf32> -> vector<16x128xf32>
    %c0_3 = arith.constant 0 : index
    %c0_4 = arith.constant 0 : index
    %3 = vector.load %arg3[%c0_3, %c0_4] : memref<1x128xf32, #tpu.memory_space<vmem>>, vector<1x128xf32>
    %4 = vector.broadcast %3 : vector<1x128xf32> to vector<16x128xf32>
    %5 = arith.addf %2, %4 : vector<16x128xf32>
    %cst_5 = arith.constant 0.000000e+00 : f32
    %6 = vector.broadcast %cst_5 : f32 to vector<16x128xf32>
    %7 = arith.maximumf %5, %6 : vector<16x128xf32>
    %8 = arith.truncf %7 : vector<16x128xf32> to vector<16x128xbf16>
    %c0_6 = arith.constant 0 : index
    %c0_7 = arith.constant 0 : index
    %9 = vector.load %arg4[%c0_6, %c0_7] : memref<128x128xbf16, #tpu.memory_space<vmem>>, vector<128x128xbf16>
    %cst_8 = arith.constant dense<0.000000e+00> : vector<16x128xf32>
    %10 = tpu.matmul %8, %9, %cst_8 {dimension_numbers = #tpu.dot_dimension_numbers<[1], [0], [0], [1], [0, 0, 1, 1], [], []>} : vector<16x128xbf16>, vector<128x128xbf16>, vector<16x128xf32> -> vector<16x128xf32>
    %c0_9 = arith.constant 0 : index
    %c0_10 = arith.constant 0 : index
    %11 = vector.load %arg5[%c0_9, %c0_10] : memref<1x128xf32, #tpu.memory_space<vmem>>, vector<1x128xf32>
    %12 = vector.broadcast %11 : vector<1x128xf32> to vector<16x128xf32>
    %13 = arith.addf %10, %12 : vector<16x128xf32>
    %c0_11 = arith.constant 0 : index
    %c0_12 = arith.constant 0 : index
    %14 = vector.load %arg6[%c0_11, %c0_12] : memref<16x128xf32, #tpu.memory_space<vmem>>, vector<16x128xf32>
    tpu.vector_store %arg6[%c0_11, %c0_12], %13 {strides = array<i32>} : memref<16x128xf32, #tpu.memory_space<vmem>>, vector<16x128xf32>,
    return
  }
  func.func @transform_0(%arg0: i32) -> (i32, i32) {
    %c0_i32 = arith.constant 0 : i32
    %c0_i32_0 = arith.constant 0 : i32
    return %arg0, %c0_i32 : i32, i32
  }
  func.func @transform_1(%arg0: i32) -> (i32, i32) {
    %c0_i32 = arith.constant 0 : i32
    %c0_i32_0 = arith.constant 0 : i32
    %c0_i32_1 = arith.constant 0 : i32
    return %c0_i32, %c0_i32_0 : i32, i32
  }
  func.func @transform_2(%arg0: i32) -> (i32, i32) {
    %c0_i32 = arith.constant 0 : i32
    %c0_i32_0 = arith.constant 0 : i32
    %c0_i32_1 = arith.constant 0 : i32
    return %c0_i32, %c0_i32_0 : i32, i32
  }
  func.func @transform_3(%arg0: i32) -> (i32, i32) {
    %c0_i32 = arith.constant 0 : i32
    %c0_i32_0 = arith.constant 0 : i32
    %c0_i32_1 = arith.constant 0 : i32
    return %c0_i32, %c0_i32_0 : i32, i32
  }
  func.func @transform_4(%arg0: i32) -> (i32, i32) {
    %c0_i32 = arith.constant 0 : i32
    %c0_i32_0 = arith.constant 0 : i32
    %c0_i32_1 = arith.constant 0 : i32
    return %c0_i32, %c0_i32_0 : i32, i32
  }
  func.func @transform_5(%arg0: i32) -> (i32, i32) {
    %c0_i32 = arith.constant 0 : i32
    %c0_i32_0 = arith.constant 0 : i32
    return %arg0, %c0_i32 : i32, i32
  }
}

</mosaic_0001>

<llo_original>
// kernel: tpu_custom_call.1
$region0: #{tpu_custom_call.1}
  #allocation0 [shape = 'u32[]', space=smem, size = 0x4, offset = 0x4, fixed_abs, tag = 'smem constant byte address 0x4 - core index']
  #allocation1 [shape = 'u32[144,128]{1,0:T(1,128)}', space=vmem, size = 0x12000, scoped, tag = 'internal scratch']
  %s0 = inlined_call_operand.hbm [shape: bf16[16,318], index: 0, kind: input, shape index: {}]
  %s1 = inlined_call_operand.hbm [shape: bf16[318,128], index: 1, kind: input, shape index: {}]
  %s2 = inlined_call_operand.vmem [shape: f32[1,128], index: 2, kind: input, shape index: {}]
  %s3 = inlined_call_operand.hbm [shape: bf16[128,128], index: 3, kind: input, shape index: {}]
  %s4 = inlined_call_operand.vmem [shape: f32[1,128], index: 4, kind: input, shape index: {}]
  %s5 = inlined_call_operand.hbm [shape: f32[16,128], index: 5, kind: output, shape index: {}]
  %s6 = sld [smem:[#allocation0]]
  $region42: #{tpu_custom_call.1} parent=0
    _
  %s8 = ssub.s32 1, %s6
  %s9 = scalar_select 0, %s8, %s6
  $region1: #{tpu_custom_call.1} parent=0
    #allocation2 [shape = 'u8[12288]{0}', space=vmem, size = 0x3000, scoped, tag = 'input window, operand 0, single buffered']
    #allocation3 [shape = 's32[1]{0}', space=sflag, size = 0x4, scoped, tag = 'scoped memory for tpu_custom_call.1']
    #allocation4 [shape = 's32[1]{0}', space=sflag, size = 0x4, scoped, tag = 'scoped memory for tpu_custom_call.1']
    #allocation5 [shape = 'u8[81920]{0}', space=vmem, size = 0x14000, scoped, tag = 'input window, operand 1, single buffered']
    #allocation6 [shape = 's32[1]{0}', space=sflag, size = 0x4, scoped, tag = 'scoped memory for tpu_custom_call.1']
    #allocation7 [shape = 'u8[32768]{0}', space=vmem, size = 0x8000, scoped, tag = 'input window, operand 3, single buffered']
    #allocation8 [shape = 'u8[8192]{0}', space=vmem, size = 0x2000, scoped, tag = 'output window, operand 0, single buffered']
    %10 = vsyncpa [#allocation3], 0
    %11 = vsyncpa [#allocation6], 0
    %12 = vsyncpa [#allocation4], 0
    // Predicated region
    $region2: #{tpu_custom_call.1} parent=1 // pred_check
      _
    $region3: #{tpu_custom_call.1} parent=1 // pred_check_branch
      %14 = sbr.rel (0) target = $region5
    $region4: #{tpu_custom_call.1} parent=1 // pred_region
      %s16 = ssub.s32 384, 384
      %17 = vsyncadd [#allocation3], %s16
      %s18 = sshll.u32 [#allocation2], 4
      %s19 = int_to_ptr.vmem [resolvable:$true] %s18
      %24 = dma.hbm_to_vmem [thread:$0]  %s0, 384, %s19, [#allocation3], 192, 192, 12
    $region5: #{tpu_custom_call.1} parent=1 // pred_fallthru
      _
    // Predicated region
    $region6: #{tpu_custom_call.1} parent=1 // pred_check
      _
    $region7: #{tpu_custom_call.1} parent=1 // pred_check_branch
      %26 = sbr.rel (0) target = $region9
    $region8: #{tpu_custom_call.1} parent=1 // pred_region
      %s28 = ssub.s32 2560, 2560
      %29 = vsyncadd [#allocation6], %s28
      %s30 = sshll.u32 [#allocation5], 4
      %s31 = int_to_ptr.vmem [resolvable:$true] %s30
      %36 = dma.hbm_to_vmem [thread:$0]  %s1, 2560, %s31, [#allocation6], 64, 64, 4
    $region9: #{tpu_custom_call.1} parent=1 // pred_fallthru
      _
    // Predicated region
    $region10: #{tpu_custom_call.1} parent=1 // pred_check
      _
    $region11: #{tpu_custom_call.1} parent=1 // pred_check_branch
      %38 = sbr.rel (0) target = $region13
    $region12: #{tpu_custom_call.1} parent=1 // pred_region
      _
    $region13: #{tpu_custom_call.1} parent=1 // pred_fallthru
      _
    // Predicated region
    $region14: #{tpu_custom_call.1} parent=1 // pred_check
      _
    $region15: #{tpu_custom_call.1} parent=1 // pred_check_branch
      %40 = sbr.rel (0) target = $region17
    $region16: #{tpu_custom_call.1} parent=1 // pred_region
      %s42 = ssub.s32 1024, 1024
      %43 = vsyncadd [#allocation6], %s42
      %s44 = sshll.u32 [#allocation7], 4
      %s45 = int_to_ptr.vmem [resolvable:$true] %s44
      %50 = dma.hbm_to_vmem [thread:$0]  %s3, 1024, %s45, [#allocation6], 64, 64, 4
    $region17: #{tpu_custom_call.1} parent=1 // pred_fallthru
      _
    // Predicated region
    $region18: #{tpu_custom_call.1} parent=1 // pred_check
      _
    $region19: #{tpu_custom_call.1} parent=1 // pred_check_branch
      %52 = sbr.rel (0) target = $region21
    $region20: #{tpu_custom_call.1} parent=1 // pred_region
      _
    $region21: #{tpu_custom_call.1} parent=1 // pred_fallthru
      _
    // Predicated region
    $region22: #{tpu_custom_call.1} parent=1 // pred_check
      _
    $region23: #{tpu_custom_call.1} parent=1 // pred_check_branch
      %54 = sbr.rel (0) target = $region25
    $region24: #{tpu_custom_call.1} parent=1 // pred_region
      %55 = dma.done [#allocation3], 384
    $region25: #{tpu_custom_call.1} parent=1 // pred_fallthru
      _
    // Predicated region
    $region26: #{tpu_custom_call.1} parent=1 // pred_check
      _
    $region27: #{tpu_custom_call.1} parent=1 // pred_check_branch
      %57 = sbr.rel (0) target = $region29
    $region28: #{tpu_custom_call.1} parent=1 // pred_region
      %58 = dma.done [#allocation6], 2560
    $region29: #{tpu_custom_call.1} parent=1 // pred_fallthru
      _
    // Predicated region
    $region30: #{tpu_custom_call.1} parent=1 // pred_check
      _
    $region31: #{tpu_custom_call.1} parent=1 // pred_check_branch
      %60 = sbr.rel (0) target = $region33
    $region32: #{tpu_custom_call.1} parent=1 // pred_region
      %61 = dma.done [#allocation6], 1024
    $region33: #{tpu_custom_call.1} parent=1 // pred_fallthru
      _
    %v63 = vld [vmem:[#allocation2] sm:$0xff]
    %v64 = vld [vmem:[#allocation2 + $0x8] sm:$0xf]
    %v65 = vld [vmem:[#allocation2 + $0xc] sm:$0xff]
    %v66 = vld [vmem:[#allocation2 + $0x14] sm:$0xf]
    %v67 = vld [vmem:[#allocation5] sm:$0xf]
    %v68 = vld [vmem:[#allocation5 + $0x4] sm:$0xf]
    %v69 = vld [vmem:[#allocation5 + $0x8] sm:$0xf]
    %v70 = vld [vmem:[#allocation5 + $0xc] sm:$0xf]
    %v71 = vld [vmem:[#allocation5 + $0x10] sm:$0xf]
    %v72 = vld [vmem:[#allocation5 + $0x14] sm:$0xf]
    %v73 = vld [vmem:[#allocation5 + $0x18] sm:$0xf]
    %v74 = vld [vmem:[#allocation5 + $0x1c] sm:$0xf]
    %v75 = vld [vmem:[#allocation5 + $0x20] sm:$0xf]
    %v76 = vld [vmem:[#allocation5 + $0x24] sm:$0xf]
    %v77 = vld [vmem:[#allocation5 + $0x28] sm:$0xf]
    %v78 = vld [vmem:[#allocation5 + $0x2c] sm:$0xf]
    %v79 = vld [vmem:[#allocation5 + $0x30] sm:$0xf]
    %v80 = vld [vmem:[#allocation5 + $0x34] sm:$0xf]
    %v81 = vld [vmem:[#allocation5 + $0x38] sm:$0xf]
    %v82 = vld [vmem:[#allocation5 + $0x3c] sm:$0xf]
    %v83 = vld [vmem:[#allocation5 + $0x40] sm:$0xf]
    %v84 = vld [vmem:[#allocation5 + $0x44] sm:$0xf]
    %v85 = vld [vmem:[#allocation5 + $0x48] sm:$0xf]
    %v86 = vld [vmem:[#allocation5 + $0x4c] sm:$0xf]
    %v87 = vld [vmem:[#allocation5 + $0x50] sm:$0xf]
    %v88 = vld [vmem:[#allocation5 + $0x54] sm:$0xf]
    %v89 = vld [vmem:[#allocation5 + $0x58] sm:$0xf]
    %v90 = vld [vmem:[#allocation5 + $0x5c] sm:$0xf]
    %v91 = vld [vmem:[#allocation5 + $0x60] sm:$0xf]
    %v92 = vld [vmem:[#allocation5 + $0x64] sm:$0xf]
    %v93 = vld [vmem:[#allocation5 + $0x68] sm:$0xf]
    %v94 = vld [vmem:[#allocation5 + $0x6c] sm:$0xf]
    %v95 = vld [vmem:[#allocation5 + $0x70] sm:$0xf]
    %v96 = vld [vmem:[#allocation5 + $0x74] sm:$0xf]
    %v97 = vld [vmem:[#allocation5 + $0x78] sm:$0xf]
    %v98 = vld [vmem:[#allocation5 + $0x7c] sm:$0xf]
    %v99 = vld [vmem:[#allocation5 + $0x80] sm:$0xf]
    %v100 = vld [vmem:[#allocation5 + $0x84] sm:$0xf]
    %v101 = vld [vmem:[#allocation5 + $0x88] sm:$0xf]
    %v102 = vld [vmem:[#allocation5 + $0x8c] sm:$0xf]
    %v103 = vld [vmem:[#allocation5 + $0x90] sm:$0xf]
    %v104 = vld [vmem:[#allocation5 + $0x94] sm:$0xf]
    %v105 = vld [vmem:[#allocation5 + $0x98] sm:$0xf]
    %v106 = vld [vmem:[#allocation5 + $0x9c] sm:$0x7]
    %v107 = vld [vmem:[%s2] sm:$0x1]
    %v109 = vlaneseq
    %v110 = vshrl.u32 %v109, 7
    %v111 = vsub.s32 0, %v110
    %v112 = vrot.slane %v107, %v111
    %v118 = vunpack.c.l.b16 %v63
    %v119 = vunpack.c.h.b16 %v63
    %v120 = vunpack.c.l.b16 %v64
    %v121 = vunpack.c.l.b16 %v65
    %v122 = vunpack.c.h.b16 %v65
    %v123 = vunpack.c.l.b16 %v66
    %v124 = vpack.c.b16 %v121, %v118
    %v125 = vpack.c.b16 %v122, %v119
    %v126 = vpack.c.b16 %v123, %v120
    %v169 = vunpack.c.l.b16 %v67
    %v170 = vunpack.c.l.b16 %v68
    %v171 = vunpack.c.l.b16 %v69
    %v172 = vunpack.c.l.b16 %v70
    %v173 = vunpack.c.l.b16 %v71
    %v174 = vunpack.c.l.b16 %v72
    %v175 = vunpack.c.l.b16 %v73
    %v176 = vunpack.c.l.b16 %v74
    %v177 = vunpack.c.l.b16 %v75
    %v178 = vunpack.c.l.b16 %v76
    %v179 = vunpack.c.l.b16 %v77
    %v180 = vunpack.c.l.b16 %v78
    %v181 = vunpack.c.l.b16 %v79
    %v182 = vunpack.c.l.b16 %v80
    %v183 = vunpack.c.l.b16 %v81
    %v184 = vunpack.c.l.b16 %v82
    %v185 = vunpack.c.l.b16 %v83
    %v186 = vunpack.c.l.b16 %v84
    %v187 = vunpack.c.l.b16 %v85
    %v188 = vunpack.c.l.b16 %v86
    %v189 = vunpack.c.l.b16 %v87
    %v190 = vunpack.c.l.b16 %v88
    %v191 = vunpack.c.l.b16 %v89
    %v192 = vunpack.c.l.b16 %v90
    %v193 = vunpack.c.l.b16 %v91
    %v194 = vunpack.c.l.b16 %v92
    %v195 = vunpack.c.l.b16 %v93
    %v196 = vunpack.c.l.b16 %v94
    %v197 = vunpack.c.l.b16 %v95
    %v198 = vunpack.c.l.b16 %v96
    %v199 = vunpack.c.l.b16 %v97
    %v200 = vunpack.c.l.b16 %v98
    %v201 = vunpack.c.l.b16 %v99
    %v202 = vunpack.c.l.b16 %v100
    %v203 = vunpack.c.l.b16 %v101
    %v204 = vunpack.c.l.b16 %v102
    %v205 = vunpack.c.l.b16 %v103
    %v206 = vunpack.c.l.b16 %v104
    %v207 = vunpack.c.l.b16 %v105
    %v208 = vunpack.c.l.b16 %v106
    %v209 = vpack.c.b16 %v170, %v169
    %v210 = vpack.c.b16 %v172, %v171
    %v211 = vpack.c.b16 %v174, %v173
    %v212 = vpack.c.b16 %v176, %v175
    %v213 = vpack.c.b16 %v178, %v177
    %v214 = vpack.c.b16 %v180, %v179
    %v215 = vpack.c.b16 %v182, %v181
    %v216 = vpack.c.b16 %v184, %v183
    %v217 = vpack.c.b16 %v186, %v185
    %v218 = vpack.c.b16 %v188, %v187
    %v219 = vpack.c.b16 %v190, %v189
    %v220 = vpack.c.b16 %v192, %v191
    %v221 = vpack.c.b16 %v194, %v193
    %v222 = vpack.c.b16 %v196, %v195
    %v223 = vpack.c.b16 %v198, %v197
    %v224 = vpack.c.b16 %v200, %v199
    %v225 = vpack.c.b16 %v202, %v201
    %v226 = vpack.c.b16 %v204, %v203
    %v227 = vpack.c.b16 %v206, %v205
    %v228 = vpack.c.b16 %v208, %v207
    %vm248 = vcmask 506880
    %v250 = vsel %vm248, %v126, 0
    %vm252 = vcmask 1046528
    %v254 = vsel %vm252, %v228, 0
    %256 = vmatprep.subr.bf16.mxu0 0
    %257 = vmatpush1.bf16.msra.mxu0 %v216
    %258 = vmatprep.subr.bf16.mxu0 0
    %259 = vmatpush1.bf16.msra.mxu0 %v215
    %260 = vmatprep.subr.bf16.mxu0 0
    %261 = vmatpush1.bf16.msra.mxu0 %v214
    %262 = vmatprep.subr.bf16.mxu0 0
    %263 = vmatpush1.bf16.msra.mxu0 %v213
    %264 = vmatprep.subr.bf16.mxu0 0
    %265 = vmatpush1.bf16.msra.mxu0 %v212
    %266 = vmatprep.subr.bf16.mxu0 0
    %267 = vmatpush1.bf16.msra.mxu0 %v211
    %268 = vmatprep.subr.bf16.mxu0 0
    %269 = vmatpush1.bf16.msra.mxu0 %v210
    %270 = vmatprep.subr.bf16.mxu0 0
    %271 = vmatpush1.bf16.msra.mxu0 %v209
    %272 = vmatprep.subr.bf16.mxu0 0
    %273 = vmatpush2.bf16.msra.mxu0 %v224
    %274 = vmatprep.subr.bf16.mxu0 0
    %275 = vmatpush2.bf16.msra.mxu0 %v223
    %276 = vmatprep.subr.bf16.mxu0 0
    %277 = vmatpush2.bf16.msra.mxu0 %v222
    %278 = vmatprep.subr.bf16.mxu0 0
    %279 = vmatpush2.bf16.msra.mxu0 %v221
    %280 = vmatprep.subr.bf16.mxu0 0
    %281 = vmatpush2.bf16.msra.mxu0 %v220
    %282 = vmatprep.subr.bf16.mxu0 0
    %283 = vmatpush2.bf16.msra.mxu0 %v219
    %284 = vmatprep.subr.bf16.mxu0 0
    %285 = vmatpush2.bf16.msra.mxu0 %v218
    %286 = vmatprep.subr.bf16.mxu0 0
    %287 = vmatpush2.bf16.msra.mxu0 %v217
    %288 = vmatprep.mubr.bf16.mxu0 %v125
    %289 = vmatmul.mubr.bf16.gmra.mxu0 %v124
    %v290 = vpop.f32.mrf.mxu0
    %v291 = vadd.f32 %v112, %v290
    %v292 = vpop.f32.mrf.mxu0
    %v293 = vpop.f32.mrf.mxu0
    %v294 = vadd.f32 %v112, %v293
    %v295 = vpop.f32.mrf.mxu0
    %296 = vdwg.mxu0
    %297 = vmatprep.subr.bf16.mxu0 0
    %298 = vmatpush1.bf16.msra.mxu0 0
    %299 = vmatprep.subr.bf16.mxu0 0
    %300 = vmatpush1.bf16.msra.mxu0 0
    %301 = vmatprep.subr.bf16.mxu0 0
    %302 = vmatpush1.bf16.msra.mxu0 0
    %303 = vmatprep.subr.bf16.mxu0 0
    %304 = vmatpush1.bf16.msra.mxu0 0
    %305 = vmatprep.subr.bf16.mxu0 0
    %306 = vmatpush1.bf16.msra.mxu0 %v254
    %307 = vmatprep.subr.bf16.mxu0 0
    %308 = vmatpush1.bf16.msra.mxu0 %v227
    %309 = vmatprep.subr.bf16.mxu0 0
    %310 = vmatpush1.bf16.msra.mxu0 %v226
    %311 = vmatprep.subr.bf16.mxu0 0
    %312 = vmatpush1.bf16.msra.mxu0 %v225
    %313 = vmatprep.subr.bf16.mxu0 0
    %314 = vmatpush2.bf16.msra.mxu0 0
    %315 = vmatprep.subr.bf16.mxu0 0
    %316 = vmatpush2.bf16.msra.mxu0 0
    %317 = vmatprep.subr.bf16.mxu0 0
    %318 = vmatpush2.bf16.msra.mxu0 0
    %319 = vmatprep.subr.bf16.mxu0 0
    %320 = vmatpush2.bf16.msra.mxu0 0
    %321 = vmatprep.subr.bf16.mxu0 0
    %322 = vmatpush2.bf16.msra.mxu0 0
    %323 = vmatprep.subr.bf16.mxu0 0
    %324 = vmatpush2.bf16.msra.mxu0 0
    %325 = vmatprep.subr.bf16.mxu0 0
    %326 = vmatpush2.bf16.msra.mxu0 0
    %327 = vmatprep.subr.bf16.mxu0 0
    %328 = vmatpush2.bf16.msra.mxu0 0
    %329 = vmatprep.mubr.bf16.mxu0 0
    %330 = vmatmul.mubr.bf16.gmra.mxu0 %v250
    %v331 = vpop.f32.mrf.mxu0
    %v332 = vadd.f32 %v291, %v331
    %v333 = vpop.f32.mrf.mxu0
    %v334 = vpop.f32.mrf.mxu0
    %v335 = vadd.f32 %v294, %v334
    %v336 = vpop.f32.mrf.mxu0
    %337 = vdwg.mxu0
    %v338 = vmax.f32 %v332, 0.0
    %v339 = vmax.f32 %v335, 0.0
    %v340 = vpack.c.bf16 %v339, %v338
    %v341 = vld [vmem:[#allocation7] sm:$0xf]
    %v342 = vld [vmem:[#allocation7 + $0x4] sm:$0xf]
    %v343 = vld [vmem:[#allocation7 + $0x8] sm:$0xf]
    %v344 = vld [vmem:[#allocation7 + $0xc] sm:$0xf]
    %v345 = vld [vmem:[#allocation7 + $0x10] sm:$0xf]
    %v346 = vld [vmem:[#allocation7 + $0x14] sm:$0xf]
    %v347 = vld [vmem:[#allocation7 + $0x18] sm:$0xf]
    %v348 = vld [vmem:[#allocation7 + $0x1c] sm:$0xf]
    %v349 = vld [vmem:[#allocation7 + $0x20] sm:$0xf]
    %v350 = vld [vmem:[#allocation7 + $0x24] sm:$0xf]
    %v351 = vld [vmem:[#allocation7 + $0x28] sm:$0xf]
    %v352 = vld [vmem:[#allocation7 + $0x2c] sm:$0xf]
    %v353 = vld [vmem:[#allocation7 + $0x30] sm:$0xf]
    %v354 = vld [vmem:[#allocation7 + $0x34] sm:$0xf]
    %v355 = vld [vmem:[#allocation7 + $0x38] sm:$0xf]
    %v356 = vld [vmem:[#allocation7 + $0x3c] sm:$0xf]
    %v357 = vld [vmem:[%s4] sm:$0x1]
    %v359 = vlaneseq
    %v360 = vshrl.u32 %v359, 7
    %v361 = vsub.s32 0, %v360
    %v362 = vrot.slane %v357, %v361
    %v380 = vunpack.c.l.b16 %v341
    %v381 = vunpack.c.l.b16 %v342
    %v382 = vunpack.c.l.b16 %v343
    %v383 = vunpack.c.l.b16 %v344
    %v384 = vunpack.c.l.b16 %v345
    %v385 = vunpack.c.l.b16 %v346
    %v386 = vunpack.c.l.b16 %v347
    %v387 = vunpack.c.l.b16 %v348
    %v388 = vunpack.c.l.b16 %v349
    %v389 = vunpack.c.l.b16 %v350
    %v390 = vunpack.c.l.b16 %v351
    %v391 = vunpack.c.l.b16 %v352
    %v392 = vunpack.c.l.b16 %v353
    %v393 = vunpack.c.l.b16 %v354
    %v394 = vunpack.c.l.b16 %v355
    %v395 = vunpack.c.l.b16 %v356
    %v396 = vpack.c.b16 %v381, %v380
    %v397 = vpack.c.b16 %v383, %v382
    %v398 = vpack.c.b16 %v385, %v384
    %v399 = vpack.c.b16 %v387, %v386
    %v400 = vpack.c.b16 %v389, %v388
    %v401 = vpack.c.b16 %v391, %v390
    %v402 = vpack.c.b16 %v393, %v392
    %v403 = vpack.c.b16 %v395, %v394
    %412 = vmatprep.subr.bf16.mxu0 0
    %413 = vmatpush1.bf16.msra.mxu0 %v403
    %414 = vmatprep.subr.bf16.mxu0 0
    %415 = vmatpush1.bf16.msra.mxu0 %v402
    %416 = vmatprep.subr.bf16.mxu0 0
    %417 = vmatpush1.bf16.msra.mxu0 %v401
    %418 = vmatprep.subr.bf16.mxu0 0
    %419 = vmatpush1.bf16.msra.mxu0 %v400
    %420 = vmatprep.subr.bf16.mxu0 0
    %421 = vmatpush1.bf16.msra.mxu0 %v399
    %422 = vmatprep.subr.bf16.mxu0 0
    %423 = vmatpush1.bf16.msra.mxu0 %v398
    %424 = vmatprep.subr.bf16.mxu0 0
    %425 = vmatpush1.bf16.msra.mxu0 %v397
    %426 = vmatprep.subr.bf16.mxu0 0
    %427 = vmatpush1.bf16.msra.mxu0 %v396
    %428 = vmatprep.subr.bf16.mxu0 0
    %429 = vmatpush2.bf16.msra.mxu0 0
    %430 = vmatprep.subr.bf16.mxu0 0
    %431 = vmatpush2.bf16.msra.mxu0 0
    %432 = vmatprep.subr.bf16.mxu0 0
    %433 = vmatpush2.bf16.msra.mxu0 0
    %434 = vmatprep.subr.bf16.mxu0 0
    %435 = vmatpush2.bf16.msra.mxu0 0
    %436 = vmatprep.subr.bf16.mxu0 0
    %437 = vmatpush2.bf16.msra.mxu0 0
    %438 = vmatprep.subr.bf16.mxu0 0
    %439 = vmatpush2.bf16.msra.mxu0 0
    %440 = vmatprep.subr.bf16.mxu0 0
    %441 = vmatpush2.bf16.msra.mxu0 0
    %442 = vmatprep.subr.bf16.mxu0 0
    %443 = vmatpush2.bf16.msra.mxu0 0
    %444 = vmatprep.mubr.bf16.mxu0 0
    %445 = vmatmul.mubr.bf16.gmra.mxu0 %v340
    %v446 = vpop.f32.mrf.mxu0
    %v447 = vadd.f32 %v362, %v446
    %v448 = vpop.f32.mrf.mxu0
    %v449 = vpop.f32.mrf.mxu0
    %v450 = vadd.f32 %v362, %v449
    %v451 = vpop.f32.mrf.mxu0
    %452 = vdwg.mxu0
    %453 = vst [vmem:[#allocation8] sm:$0xff] %v447
    %454 = vst [vmem:[#allocation8 + $0x8] sm:$0xff] %v450
    // Predicated region
    $region34: #{tpu_custom_call.1} parent=1 // pred_check
      _
    $region35: #{tpu_custom_call.1} parent=1 // pred_check_branch
      %456 = sbr.rel (0) target = $region37
    $region36: #{tpu_custom_call.1} parent=1 // pred_region
      %s458 = ssub.s32 256, 256
      %459 = vsyncadd [#allocation4], %s458
      %s460 = sshll.u32 [#allocation8], 4
      %s461 = int_to_ptr.vmem [resolvable:$true] %s460
      %466 = dma.vmem_to_hbm [thread:$0]  %s461, 256, %s5, [#allocation4], 128, 128, 8
    $region37: #{tpu_custom_call.1} parent=1 // pred_fallthru
      _
    // Predicated region
    $region38: #{tpu_custom_call.1} parent=1 // pred_check
      _
    $region39: #{tpu_custom_call.1} parent=1 // pred_check_branch
      %468 = sbr.rel (0) target = $region41
    $region40: #{tpu_custom_call.1} parent=1 // pred_region
      %469 = dma.done [#allocation4], 256
    $region41: #{tpu_custom_call.1} parent=1 // pred_fallthru
      _
    %470 = vsyncpa [#allocation3], 1
    %471 = vsyncpa [#allocation6], 1
    %472 = vsyncpa [#allocation4], 1

</llo_original>
